<compile_context>
chip_gen: v6e
topology: v6e:2x2x1
jax: 0.10.0
libtpu: 0.0.40
codegen_flags: <defaults>
</compile_context>

<pallas_src>
import functools

import jax
import jax.numpy as jnp
from jax.experimental import pallas as pl
from jax.experimental.pallas import tpu as pltpu


# --------------------------------------------------------------------------- #
# Kernels
# --------------------------------------------------------------------------- #
def _heat_kernel_fullk(l_ref, x_ref, o_ref, *, k):
    """Single reduction step: out = -k * (L_tile @ X), no accumulator scratch."""
    o_ref[...] = (
        (-k)
        * jnp.dot(l_ref[...], x_ref[...], preferred_element_type=jnp.float32)
    ).astype(o_ref.dtype)


def _heat_kernel_acc(l_ref, x_ref, o_ref, acc_ref, *, k):
    """K-tiled reduction (grid axis 1 is the reduction); -k folded in epilogue."""

    @pl.when(pl.program_id(1) == 0)
    def _():
        acc_ref[...] = jnp.zeros_like(acc_ref)

    acc_ref[...] += jnp.dot(
        l_ref[...], x_ref[...], preferred_element_type=jnp.float32
    )

    @pl.when(pl.program_id(1) == pl.num_programs(1) - 1)
    def _():
        o_ref[...] = ((-k) * acc_ref[...]).astype(o_ref.dtype)


# --------------------------------------------------------------------------- #
# Tiling helpers
# --------------------------------------------------------------------------- #
def _pick_tile(n, cap, align):
    """Largest divisor of n that is <= cap and a multiple of `align`.

    Returns n itself (full extent, always a legal BlockSpec) when n <= cap or
    when no aligned divisor below the cap exists.
    """
    if n <= cap:
        return n
    best = 0
    d = align
    while d <= cap:
        if n % d == 0:
            best = d
        d += align
    return best if best > 0 else n


# --------------------------------------------------------------------------- #
# Wrapper
# --------------------------------------------------------------------------- #
def heat_diffusion(L, x, k=1.0, *, vmem_budget_bytes=36 * 1024 * 1024):
    """JAX/Pallas equivalent of HeatDiffusion.forward(t, x): k * ((-L) @ x)."""
    N, K = L.shape
    K2, D = x.shape
    assert K == K2, "L must be (N, N) and x (N, D)"
    bytes_per = 4  # f32 tiles

    # --- row tile: target 512; keep >= 2 row-steps (when possible) so v7x can
    #     shard the row axis across its 2 TensorCores (j axis already absent).
    tm = _pick_tile(N, 512, 8)
    if N // tm < 2 and N > 8:
        tm_half = _pick_tile(N, max(8, N // 2), 8)
        if tm_half >= 8 and N % tm_half == 0:
            tm = tm_half

    # --- reduction tile: prefer full-K (collapses reduction axis, no
    #     accumulator round-trips); otherwise largest 128-aligned divisor that
    #     fits the VMEM budget.
    def _footprint(tm_, tk_):
        # double-buffered L tile + double-buffered X tile
        # + double-buffered out tile + f32 accumulator
        return bytes_per * (2 * tm_ * tk_ + 2 * tk_ * D + 3 * tm_ * D)

    if _footprint(tm, K) <= vmem_budget_bytes:
        tk = K
    else:
        tk_cap = (vmem_budget_bytes // bytes_per - 3 * tm * D) // (2 * (tm + D))
        tk = _pick_tile(K, max(128, tk_cap), 128)

    assert N % tm == 0 and K % tk == 0, "tile selection must divide shapes evenly"

    kt = K // tk
    cost = pl.CostEstimate(
        flops=2 * N * K * D,
        transcendentals=0,
        bytes_accessed=bytes_per * (N * K + K * D + N * D),
    )
    cparams_kwargs = dict(vmem_limit_bytes=48 * 1024 * 1024)

    if kt == 1:
        # Full-K reduction in one step: no scratch, no init/finalize branches.
        kernel = functools.partial(_heat_kernel_fullk, k=float(k))
        return pl.pallas_call(
            kernel,
            out_shape=jax.ShapeDtypeStruct((N, D), x.dtype),
            grid_spec=pltpu.PrefetchScalarGridSpec(
                num_scalar_prefetch=0,
                grid=(N // tm,),
                in_specs=[
                    pl.BlockSpec((tm, K), lambda i: (i, 0)),  # L row-tile
                    pl.BlockSpec((K, D), lambda i: (0, 0)),   # full X (resident)
                ],
                out_specs=pl.BlockSpec((tm, D), lambda i: (i, 0)),
            ),
            compiler_params=pltpu.CompilerParams(
                dimension_semantics=("parallel",), **cparams_kwargs
            ),
            cost_estimate=cost,
        )(L, x)

    # K-tiled path (large N): reduction axis last, f32 accumulator in VMEM.
    kernel = functools.partial(_heat_kernel_acc, k=float(k))
    return pl.pallas_call(
        kernel,
        out_shape=jax.ShapeDtypeStruct((N, D), x.dtype),
        grid_spec=pltpu.PrefetchScalarGridSpec(
            num_scalar_prefetch=0,
            grid=(N // tm, kt),
            in_specs=[
                pl.BlockSpec((tm, tk), lambda i, kk: (i, kk)),  # L tile
                pl.BlockSpec((tk, D), lambda i, kk: (kk, 0)),   # X tile (full D)
            ],
            out_specs=pl.BlockSpec((tm, D), lambda i, kk: (i, 0)),
            scratch_shapes=[pltpu.VMEM((tm, D), jnp.float32)],
        ),
        compiler_params=pltpu.CompilerParams(
            dimension_semantics=("parallel", "arbitrary"), **cparams_kwargs
        ),
        cost_estimate=cost,
    )(L, x)


# TODO(synk): torch.sparse.mm branch (sparse Laplacian) has no dense-BlockSpec
# equivalent here; a sparse L would need a scalar-prefetch gather kernel.

if __name__ == "__main__":
    # Small synthetic problem: N = 256 nodes, D = 128 feature dims.
    N, D = 256, 128
    k = 1.0

    key = jax.random.PRNGKey(0)
    key_a, key_x = jax.random.split(key)

    # Deterministic graph-Laplacian-like matrix L = Dg - A (symmetric).
    A = jax.random.uniform(key_a, (N, N), dtype=jnp.float32)
    A = 0.5 * (A + A.T)
    A = A - jnp.diag(jnp.diag(A))
    Dg = jnp.diag(jnp.sum(A, axis=1))
    L = (Dg - A).astype(jnp.float32)

    x = jax.random.normal(key_x, (N, D), dtype=jnp.float32)

    out = heat_diffusion(L, x, k=k)
    out = jax.block_until_ready(out)

    # Reference: forward(t, x) = k * ((-L) @ x). Relative-error check so MXU
    # vs. XLA matmul precision differences cannot cause a false failure.
    ref = k * jnp.matmul(-L, x)
    assert out.shape == (N, D)
    rel_err = jnp.linalg.norm(out - ref) / (jnp.linalg.norm(ref) + 1e-6)
    assert float(rel_err) < 1e-3, f"mismatch vs reference (rel_err={rel_err})"

    print("KERNEL_OK")
</pallas_src>

<mosaic_0001>
module attributes {stable_mosaic.version = 11 : i64} {
  func.func @_heat_kernel_fullk(%arg0: i32, %arg1: memref<128x256xf32, #tpu.memory_space<vmem>>, %arg2: memref<256x128xf32, #tpu.memory_space<vmem>>, %arg3: memref<128x128xf32, #tpu.memory_space<vmem>>) attributes {dimension_semantics = [#tpu.dimension_semantics<parallel>], iteration_bounds = array<i64: 2>, scalar_prefetch = 0 : i64, scratch_operands = 0 : i64, tpu.core_type = #tpu.core_type<tc>, window_params = [{transform_indices = @transform_0, window_bounds = array<i64: 128, 256>}, {pipeline_mode = #tpu.pipeline_mode<synchronous>, transform_indices = @transform_1, window_bounds = array<i64: 256, 128>}, {transform_indices = @transform_2, window_bounds = array<i64: 128, 128>}]} {
    %c0 = arith.constant 0 : index
    %c0_0 = arith.constant 0 : index
    %0 = vector.load %arg1[%c0, %c0_0] : memref<128x256xf32, #tpu.memory_space<vmem>>, vector<128x256xf32>
    %c0_1 = arith.constant 0 : index
    %c0_2 = arith.constant 0 : index
    %1 = vector.load %arg2[%c0_1, %c0_2] : memref<256x128xf32, #tpu.memory_space<vmem>>, vector<256x128xf32>
    %cst = arith.constant dense<0.000000e+00> : vector<128x128xf32>
    %2 = tpu.matmul %0, %1, %cst {dimension_numbers = #tpu.dot_dimension_numbers<[1], [0], [0], [1], [0, 0, 1, 1], [], []>} : vector<128x256xf32>, vector<256x128xf32>, vector<128x128xf32> -> vector<128x128xf32>
    %cst_3 = arith.constant -1.000000e+00 : f32
    %3 = vector.broadcast %cst_3 : f32 to vector<128x128xf32>
    %4 = arith.mulf %3, %2 : vector<128x128xf32>
    %c0_4 = arith.constant 0 : index
    %c0_5 = arith.constant 0 : index
    %5 = vector.load %arg3[%c0_4, %c0_5] : memref<128x128xf32, #tpu.memory_space<vmem>>, vector<128x128xf32>
    tpu.vector_store %arg3[%c0_4, %c0_5], %4 {strides = array<i32>} : memref<128x128xf32, #tpu.memory_space<vmem>>, vector<128x128xf32>,
    return
  }
  func.func @transform_0(%arg0: i32) -> (i32, i32) {
    %c0_i32 = arith.constant 0 : i32
    %c0_i32_0 = arith.constant 0 : i32
    return %arg0, %c0_i32 : i32, i32
  }
  func.func @transform_1(%arg0: i32) -> (i32, i32) {
    %c0_i32 = arith.constant 0 : i32
    %c0_i32_0 = arith.constant 0 : i32
    %c0_i32_1 = arith.constant 0 : i32
    return %c0_i32, %c0_i32_0 : i32, i32
  }
  func.func @transform_2(%arg0: i32) -> (i32, i32) {
    %c0_i32 = arith.constant 0 : i32
    %c0_i32_0 = arith.constant 0 : i32
    return %arg0, %c0_i32 : i32, i32
  }
}

</mosaic_0001>

<llo_original>
// kernel: tpu_custom_call.1
$region0: #{tpu_custom_call.1}
  #allocation0 [shape = 'u32[]', space=smem, size = 0x4, offset = 0x4, fixed_abs, tag = 'smem constant byte address 0x4 - core index']
  #allocation1 [shape = 'u32[144,128]{1,0:T(1,128)}', space=vmem, size = 0x12000, scoped, tag = 'internal scratch']
  %s0 = inlined_call_operand.hbm [shape: f32[256,256], index: 0, kind: input, shape index: {}]
  %s1 = inlined_call_operand.hbm [shape: f32[256,128], index: 1, kind: input, shape index: {}]
  %s2 = inlined_call_operand.hbm [shape: f32[256,128], index: 2, kind: output, shape index: {}]
  %s3 = sld [smem:[#allocation0]]
  $region49: #{tpu_custom_call.1} parent=0
    _
  %s5 = ssub.s32 1, %s3
  %s6 = scalar_select 0, %s5, %s3
  $region1: #{tpu_custom_call.1} parent=0
    #allocation2 [shape = 'u8[262144]{0}', space=vmem, size = 0x40000, scoped, tag = 'input window, operand 0']
    #allocation3 [shape = 's32[2]{0}', space=sflag, size = 0x8, scoped, tag = 'scoped memory for tpu_custom_call.1']
    #allocation4 [shape = 's32[2]{0}', space=sflag, size = 0x8, scoped, tag = 'scoped memory for tpu_custom_call.1']
    #allocation5 [shape = 'u8[131072]{0}', space=vmem, size = 0x20000, scoped, tag = 'input window, operand 1, single buffered']
    #allocation6 [shape = 's32[1]{0}', space=sflag, size = 0x4, scoped, tag = 'scoped memory for tpu_custom_call.1']
    #allocation7 [shape = 'u8[131072]{0}', space=vmem, size = 0x20000, scoped, tag = 'output window, operand 0']
    %7 = vsyncpa [#allocation3], 0
    %s8 = scalar_lea.sflag [#allocation3], 1
    %9 = vsyncpa %s8, 0
    %10 = vsyncpa [#allocation6], 0
    %11 = vsyncpa [#allocation4], 0
    %s12 = scalar_lea.sflag [#allocation4], 1
    %13 = vsyncpa %s12, 0
    loop: start=0, step=1, limit=4
    $region2: #{tpu_custom_call.1} parent=1 // loop_pre_header
      _
    $region3: #{tpu_custom_call.1} parent=1 // loop_header
      %s15 = sphi 0, %s19
      %p16 = scmp.ge.s32.totalorder %s15, 4
      %s25 = sphi 0, %s27
      %s28 = sphi 0, %s25
      %s29 = sphi 0, %s28
      %s45 = sphi 0, %s29
      %s49 = sphi 0, %s49
      %s51 = sphi 0, %s49
      %s52 = sphi 0, %s51
      %s66 = sphi 0, %s52
      %s72 = sphi 0, %s74
      %s75 = sphi 0, %s72
      %s76 = sphi 0, %s75
      %s92 = sphi 0, %s76
    $region4: #{tpu_custom_call.1} parent=1 // loop_header_branch
      %18 = sbr.rel (%p16) target = $region8
    $region5: #{tpu_custom_call.1} parent=1 // loop_body
      %s20 = ssub.s32 %s15, 1
      %s21 = ssub.s32 %s15, 2
      %s22 = sadd.s32 %s15, 1
      %s23 = ssub.s32 %s15, %s22
      %p24 = scmp.eq.s32.totalorder %s23, 0
      %s26 = sadd.s32 %s25, 1
      %s27 = scalar_select %p24, %s25, %s26
      %p30 = pneg %p24
      %p31 = scmp.eq.s32.totalorder %s15, 1
      %p32 = por %p30, %p31
      %p33 = scmp.ne.s32.totalorder %s25, %s28
      %p34 = scmp.eq.s32.totalorder %s15, 0
      %p35 = por %p33, %p34
      %p36 = scmp.ne.s32.totalorder %s25, %s28
      %p37 = scmp.eq.s32.totalorder %s20, 1
      %p38 = por %p36, %p37
      %p39 = scmp.ne.s32.totalorder %s28, %s29
      %p40 = scmp.eq.s32.totalorder %s20, 0
      %p41 = por %p39, %p40
      %p42 = scmp.ne.s32.totalorder %s28, %s29
      %p43 = scmp.eq.s32.totalorder %s21, 1
      %p44 = por %p42, %p43
      %p46 = scmp.ne.s32.totalorder %s29, %s45
      %p47 = scmp.eq.s32.totalorder %s21, 0
      %p48 = por %p46, %p47
      %s50 = sadd.s32 %s49, 1
      %p53 = scmp.eq.s32.totalorder %s15, 1
      %p54 = scmp.ne.s32.totalorder %s49, %s51
      %p55 = scmp.eq.s32.totalorder %s15, 0
      %p56 = por %p54, %p55
      %p57 = scmp.ne.s32.totalorder %s49, %s51
      %p58 = scmp.eq.s32.totalorder %s20, 1
      %p59 = por %p57, %p58
      %p60 = scmp.ne.s32.totalorder %s51, %s52
      %p61 = scmp.eq.s32.totalorder %s20, 0
      %p62 = por %p60, %p61
      %p63 = scmp.ne.s32.totalorder %s51, %s52
      %p64 = scmp.eq.s32.totalorder %s21, 1
      %p65 = por %p63, %p64
      %p67 = scmp.ne.s32.totalorder %s52, %s66
      %p68 = scmp.eq.s32.totalorder %s21, 0
      %p69 = por %p67, %p68
      %s70 = ssub.s32 %s15, %s22
      %p71 = scmp.eq.s32.totalorder %s70, 0
      %s73 = sadd.s32 %s72, 1
      %s74 = scalar_select %p71, %s72, %s73
      %p77 = pneg %p71
      %p78 = scmp.eq.s32.totalorder %s15, 1
      %p79 = por %p77, %p78
      %p80 = scmp.ne.s32.totalorder %s72, %s75
      %p81 = scmp.eq.s32.totalorder %s15, 0
      %p82 = por %p80, %p81
      %p83 = scmp.ne.s32.totalorder %s72, %s75
      %p84 = scmp.eq.s32.totalorder %s20, 1
      %p85 = por %p83, %p84
      %p86 = scmp.ne.s32.totalorder %s75, %s76
      %p87 = scmp.eq.s32.totalorder %s20, 0
      %p88 = por %p86, %p87
      %p89 = scmp.ne.s32.totalorder %s75, %s76
      %p90 = scmp.eq.s32.totalorder %s21, 1
      %p91 = por %p89, %p90
      %p93 = scmp.ne.s32.totalorder %s76, %s92
      %p94 = scmp.eq.s32.totalorder %s21, 0
      %p95 = por %p93, %p94
      %p96 = scmp.le.s32.totalorder 1, %s15
      %p97 = scmp.lt.s32.totalorder %s15, 3
      %p98 = pnand %p96, %p97
      %p99 = pneg %p98
      // Predicated region
      $region9: #{tpu_custom_call.1} parent=5 // pred_check
        _
      $region10: #{tpu_custom_call.1} parent=5 // pred_check_branch
        %101 = sbr.rel (%p98) target = $region12
      $region11: #{tpu_custom_call.1} parent=5 // pred_region
        %s102 = ssub.s32 %s15, 1
        // Predicated region
        $region13: #{tpu_custom_call.1} parent=11 // pred_check
          %p103 = pneg %p62
        $region14: #{tpu_custom_call.1} parent=11 // pred_check_branch
          %105 = sbr.rel (%p103) target = $region16
        $region15: #{tpu_custom_call.1} parent=11 // pred_region
          %s107 = ssub.s32 4096, 4096
          %108 = vsyncadd [#allocation6], %s107
          %s109 = sshll.u32 [#allocation5], 4
          %s110 = int_to_ptr.vmem [resolvable:$true] %s109
          %115 = dma.hbm_to_vmem [thread:$0]  %s1, 4096, %s110, [#allocation6], 128, 128, 8
        $region16: #{tpu_custom_call.1} parent=11 // pred_fallthru
          _
      $region12: #{tpu_custom_call.1} parent=5 // pred_fallthru
        _
      %p116 = scmp.lt.s32.totalorder %s15, 2
      // Predicated region
      $region17: #{tpu_custom_call.1} parent=5 // pred_check
        %p117 = pneg %p116
      $region18: #{tpu_custom_call.1} parent=5 // pred_check_branch
        %119 = sbr.rel (%p117) target = $region20
      $region19: #{tpu_custom_call.1} parent=5 // pred_region
        // Predicated region
        $region21: #{tpu_custom_call.1} parent=19 // pred_check
          %p120 = pneg %p35
        $region22: #{tpu_custom_call.1} parent=19 // pred_check_branch
          %122 = sbr.rel (%p120) target = $region24
        $region23: #{tpu_custom_call.1} parent=19 // pred_region
          %s123 = sand.u32 %s25, 1
          %s124 = scalar_lea.sflag [#allocation3], %s123
          %s125 = sand.u32 %s25, 1
          %s126 = smul.addr %s125, 256
          %s127 = scalar_lea.vmem [#allocation2], %s126
          %s128 = smul.u32 16, %s15
          %s130 = ssub.s32 4096, 4096
          %131 = vsyncadd %s124, %s130
          %s132 = smul.addr %s128, 2
          %s133 = smul.addr %s132, 128
          %s134 = scalar_lea.hbm %s0, %s133
          %s135 = sshll.u32 %s127, 4
          %s136 = int_to_ptr.vmem [resolvable:$true] %s135
          %141 = dma.hbm_to_vmem [thread:$0]  %s134, 4096, %s136, %s124, 256, 256, 16
        $region24: #{tpu_custom_call.1} parent=19 // pred_fallthru
          _
      $region20: #{tpu_custom_call.1} parent=5 // pred_fallthru
        _
      %p142 = scmp.le.s32.totalorder 1, %s15
      %p143 = scmp.lt.s32.totalorder %s15, 3
      %p144 = pnand %p142, %p143
      %p145 = pneg %p144
      // Predicated region
      $region25: #{tpu_custom_call.1} parent=5 // pred_check
        _
      $region26: #{tpu_custom_call.1} parent=5 // pred_check_branch
        %147 = sbr.rel (%p144) target = $region28
      $region27: #{tpu_custom_call.1} parent=5 // pred_region
        %s148 = ssub.s32 %s15, 1
        %s149 = sand.u32 %s28, 1
        %s150 = scalar_lea.sflag [#allocation3], %s149
        %s151 = sand.u32 %s28, 1
        %s152 = smul.addr %s151, 256
        %s153 = scalar_lea.vmem [#allocation2], %s152
        // Predicated region
        $region29: #{tpu_custom_call.1} parent=27 // pred_check
          %p154 = pneg %p41
        $region30: #{tpu_custom_call.1} parent=27 // pred_check_branch
          %156 = sbr.rel (%p154) target = $region32
        $region31: #{tpu_custom_call.1} parent=27 // pred_region
          %157 = dma.done %s150, 4096
        $region32: #{tpu_custom_call.1} parent=27 // pred_fallthru
          _
        // Predicated region
        $region33: #{tpu_custom_call.1} parent=27 // pred_check
          %p158 = pneg %p62
        $region34: #{tpu_custom_call.1} parent=27 // pred_check_branch
          %160 = sbr.rel (%p158) target = $region36
        $region35: #{tpu_custom_call.1} parent=27 // pred_region
          %161 = dma.done [#allocation6], 4096
        $region36: #{tpu_custom_call.1} parent=27 // pred_fallthru
          _
        %s162 = sand.u32 %s28, 1
        %s163 = scalar_lea.sflag [#allocation3], %s162
        %s164 = sand.u32 %s28, 1
        %s165 = smul.addr %s164, 256
        %s166 = scalar_lea.vmem [#allocation2], %s165
        %p167 = pneg %p41
        %p168 = pneg %p38
        %p169 = pneg %p62
        %p170 = pneg %p59
        %p171 = pneg %p88
        %p172 = pneg %p85
        %s173 = sand.u32 %s75, 1
        %s174 = scalar_lea.sflag [#allocation4], %s173
        %s175 = sand.u32 %s75, 1
        %s176 = smul.addr %s175, 128
        %s177 = scalar_lea.vmem [#allocation7], %s176
        %s178 = smul.u32 16, %s20
        %s179 = smul.u32 16, %s20
        %v180 = vld [vmem:[%s153] sm:$0xff]
        %v181 = vld [vmem:[%s153 + $0x8] sm:$0xff]
        %v182 = vld [vmem:[%s153 + $0x10] sm:$0xff]
        %v183 = vld [vmem:[%s153 + $0x18] sm:$0xff]
        %v184 = vld [vmem:[%s153 + $0x20] sm:$0xff]
        %v185 = vld [vmem:[%s153 + $0x28] sm:$0xff]
        %v186 = vld [vmem:[%s153 + $0x30] sm:$0xff]
        %v187 = vld [vmem:[%s153 + $0x38] sm:$0xff]
        %v188 = vld [vmem:[%s153 + $0x40] sm:$0xff]
        %v189 = vld [vmem:[%s153 + $0x48] sm:$0xff]
        %v190 = vld [vmem:[%s153 + $0x50] sm:$0xff]
        %v191 = vld [vmem:[%s153 + $0x58] sm:$0xff]
        %v192 = vld [vmem:[%s153 + $0x60] sm:$0xff]
        %v193 = vld [vmem:[%s153 + $0x68] sm:$0xff]
        %v194 = vld [vmem:[%s153 + $0x70] sm:$0xff]
        %v195 = vld [vmem:[%s153 + $0x78] sm:$0xff]
        %v196 = vld [vmem:[%s153 + $0x80] sm:$0xff]
        %v197 = vld [vmem:[%s153 + $0x88] sm:$0xff]
        %v198 = vld [vmem:[%s153 + $0x90] sm:$0xff]
        %v199 = vld [vmem:[%s153 + $0x98] sm:$0xff]
        %v200 = vld [vmem:[%s153 + $0xa0] sm:$0xff]
        %v201 = vld [vmem:[%s153 + $0xa8] sm:$0xff]
        %v202 = vld [vmem:[%s153 + $0xb0] sm:$0xff]
        %v203 = vld [vmem:[%s153 + $0xb8] sm:$0xff]
        %v204 = vld [vmem:[%s153 + $0xc0] sm:$0xff]
        %v205 = vld [vmem:[%s153 + $0xc8] sm:$0xff]
        %v206 = vld [vmem:[%s153 + $0xd0] sm:$0xff]
        %v207 = vld [vmem:[%s153 + $0xd8] sm:$0xff]
        %v208 = vld [vmem:[%s153 + $0xe0] sm:$0xff]
        %v209 = vld [vmem:[%s153 + $0xe8] sm:$0xff]
        %v210 = vld [vmem:[%s153 + $0xf0] sm:$0xff]
        %v211 = vld [vmem:[%s153 + $0xf8] sm:$0xff]
        %v212 = vld [vmem:[#allocation5] sm:$0xff]
        %v213 = vld [vmem:[#allocation5 + $0x8] sm:$0xff]
        %v214 = vld [vmem:[#allocation5 + $0x10] sm:$0xff]
        %v215 = vld [vmem:[#allocation5 + $0x18] sm:$0xff]
        %v216 = vld [vmem:[#allocation5 + $0x20] sm:$0xff]
        %v217 = vld [vmem:[#allocation5 + $0x28] sm:$0xff]
        %v218 = vld [vmem:[#allocation5 + $0x30] sm:$0xff]
        %v219 = vld [vmem:[#allocation5 + $0x38] sm:$0xff]
        %v220 = vld [vmem:[#allocation5 + $0x40] sm:$0xff]
        %v221 = vld [vmem:[#allocation5 + $0x48] sm:$0xff]
        %v222 = vld [vmem:[#allocation5 + $0x50] sm:$0xff]
        %v223 = vld [vmem:[#allocation5 + $0x58] sm:$0xff]
        %v224 = vld [vmem:[#allocation5 + $0x60] sm:$0xff]
        %v225 = vld [vmem:[#allocation5 + $0x68] sm:$0xff]
        %v226 = vld [vmem:[#allocation5 + $0x70] sm:$0xff]
        %v227 = vld [vmem:[#allocation5 + $0x78] sm:$0xff]
        %v228 = vld [vmem:[#allocation5 + $0x80] sm:$0xff]
        %v229 = vld [vmem:[#allocation5 + $0x88] sm:$0xff]
        %v230 = vld [vmem:[#allocation5 + $0x90] sm:$0xff]
        %v231 = vld [vmem:[#allocation5 + $0x98] sm:$0xff]
        %v232 = vld [vmem:[#allocation5 + $0xa0] sm:$0xff]
        %v233 = vld [vmem:[#allocation5 + $0xa8] sm:$0xff]
        %v234 = vld [vmem:[#allocation5 + $0xb0] sm:$0xff]
        %v235 = vld [vmem:[#allocation5 + $0xb8] sm:$0xff]
        %v236 = vld [vmem:[#allocation5 + $0xc0] sm:$0xff]
        %v237 = vld [vmem:[#allocation5 + $0xc8] sm:$0xff]
        %v238 = vld [vmem:[#allocation5 + $0xd0] sm:$0xff]
        %v239 = vld [vmem:[#allocation5 + $0xd8] sm:$0xff]
        %v240 = vld [vmem:[#allocation5 + $0xe0] sm:$0xff]
        %v241 = vld [vmem:[#allocation5 + $0xe8] sm:$0xff]
        %v242 = vld [vmem:[#allocation5 + $0xf0] sm:$0xff]
        %v243 = vld [vmem:[#allocation5 + $0xf8] sm:$0xff]
        %244 = vmatprep.subr.mxu0 0.0
        %245 = vmatpush1.msra.mxu0 %v227
        %246 = vmatprep.subr.mxu0 0.0
        %247 = vmatpush1.msra.mxu0 %v226
        %248 = vmatprep.subr.mxu0 0.0
        %249 = vmatpush1.msra.mxu0 %v225
        %250 = vmatprep.subr.mxu0 0.0
        %251 = vmatpush1.msra.mxu0 %v224
        %252 = vmatprep.subr.mxu0 0.0
        %253 = vmatpush1.msra.mxu0 %v223
        %254 = vmatprep.subr.mxu0 0.0
        %255 = vmatpush1.msra.mxu0 %v222
        %256 = vmatprep.subr.mxu0 0.0
        %257 = vmatpush1.msra.mxu0 %v221
        %258 = vmatprep.subr.mxu0 0.0
        %259 = vmatpush1.msra.mxu0 %v220
        %260 = vmatprep.subr.mxu0 0.0
        %261 = vmatpush1.msra.mxu0 %v219
        %262 = vmatprep.subr.mxu0 0.0
        %263 = vmatpush1.msra.mxu0 %v218
        %264 = vmatprep.subr.mxu0 0.0
        %265 = vmatpush1.msra.mxu0 %v217
        %266 = vmatprep.subr.mxu0 0.0
        %267 = vmatpush1.msra.mxu0 %v216
        %268 = vmatprep.subr.mxu0 0.0
        %269 = vmatpush1.msra.mxu0 %v215
        %270 = vmatprep.subr.mxu0 0.0
        %271 = vmatpush1.msra.mxu0 %v214
        %272 = vmatprep.subr.mxu0 0.0
        %273 = vmatpush1.msra.mxu0 %v213
        %274 = vmatprep.subr.mxu0 0.0
        %275 = vmatpush1.msra.mxu0 %v212
        %276 = vmatprep.subr.mxu0 0.0
        %277 = vmatpush2.msra.mxu0 %v243
        %278 = vmatprep.subr.mxu0 0.0
        %279 = vmatpush2.msra.mxu0 %v242
        %280 = vmatprep.subr.mxu0 0.0
        %281 = vmatpush2.msra.mxu0 %v241
        %282 = vmatprep.subr.mxu0 0.0
        %283 = vmatpush2.msra.mxu0 %v240
        %284 = vmatprep.subr.mxu0 0.0
        %285 = vmatpush2.msra.mxu0 %v239
        %286 = vmatprep.subr.mxu0 0.0
        %287 = vmatpush2.msra.mxu0 %v238
        %288 = vmatprep.subr.mxu0 0.0
        %289 = vmatpush2.msra.mxu0 %v237
        %290 = vmatprep.subr.mxu0 0.0
        %291 = vmatpush2.msra.mxu0 %v236
        %292 = vmatprep.subr.mxu0 0.0
        %293 = vmatpush2.msra.mxu0 %v235
        %294 = vmatprep.subr.mxu0 0.0
        %295 = vmatpush2.msra.mxu0 %v234
        %296 = vmatprep.subr.mxu0 0.0
        %297 = vmatpush2.msra.mxu0 %v233
        %298 = vmatprep.subr.mxu0 0.0
        %299 = vmatpush2.msra.mxu0 %v232
        %300 = vmatprep.subr.mxu0 0.0
        %301 = vmatpush2.msra.mxu0 %v231
        %302 = vmatprep.subr.mxu0 0.0
        %303 = vmatpush2.msra.mxu0 %v230
        %304 = vmatprep.subr.mxu0 0.0
        %305 = vmatpush2.msra.mxu0 %v229
        %306 = vmatprep.subr.mxu0 0.0
        %307 = vmatpush2.msra.mxu0 %v228
        %308 = vmatprep.mubr.f32.mxu0 %v181
        %309 = vmatmul.mubr.f32.gmra.mxu0 %v180
        %v310 = vpop.f32.mrf.mxu0
        %v311 = vadd.f32 0.0, %v310
        %v312 = vpop.f32.mrf.mxu0
        %313 = vmatprep.mubr.f32.mxu0 %v183
        %314 = vmatmul.mubr.f32.gmra.mxu0 %v182
        %v315 = vpop.f32.mrf.mxu0
        %v316 = vadd.f32 0.0, %v315
        %v317 = vpop.f32.mrf.mxu0
        %318 = vmatprep.mubr.f32.mxu0 %v185
        %319 = vmatmul.mubr.f32.gmra.mxu0 %v184
        %v320 = vpop.f32.mrf.mxu0
        %v321 = vadd.f32 0.0, %v320
        %v322 = vpop.f32.mrf.mxu0
        %323 = vmatprep.mubr.f32.mxu0 %v187
        %324 = vmatmul.mubr.f32.gmra.mxu0 %v186
        %v325 = vpop.f32.mrf.mxu0
        %v326 = vadd.f32 0.0, %v325
        %v327 = vpop.f32.mrf.mxu0
        %328 = vmatprep.mubr.f32.mxu0 %v189
        %329 = vmatmul.mubr.f32.gmra.mxu0 %v188
        %v330 = vpop.f32.mrf.mxu0
        %v331 = vadd.f32 0.0, %v330
        %v332 = vpop.f32.mrf.mxu0
        %333 = vmatprep.mubr.f32.mxu0 %v191
        %334 = vmatmul.mubr.f32.gmra.mxu0 %v190
        %v335 = vpop.f32.mrf.mxu0
        %v336 = vadd.f32 0.0, %v335
        %v337 = vpop.f32.mrf.mxu0
        %338 = vmatprep.mubr.f32.mxu0 %v193
        %339 = vmatmul.mubr.f32.gmra.mxu0 %v192
        %v340 = vpop.f32.mrf.mxu0
        %v341 = vadd.f32 0.0, %v340
        %v342 = vpop.f32.mrf.mxu0
        %343 = vmatprep.mubr.f32.mxu0 %v195
        %344 = vmatmul.mubr.f32.gmra.mxu0 %v194
        %v345 = vpop.f32.mrf.mxu0
        %v346 = vadd.f32 0.0, %v345
        %v347 = vpop.f32.mrf.mxu0
        %348 = vmatprep.mubr.f32.mxu0 %v197
        %349 = vmatmul.mubr.f32.gmra.mxu0 %v196
        %v350 = vpop.f32.mrf.mxu0
        %v351 = vadd.f32 0.0, %v350
        %v352 = vpop.f32.mrf.mxu0
        %353 = vmatprep.mubr.f32.mxu0 %v199
        %354 = vmatmul.mubr.f32.gmra.mxu0 %v198
        %v355 = vpop.f32.mrf.mxu0
        %v356 = vadd.f32 0.0, %v355
        %v357 = vpop.f32.mrf.mxu0
        %358 = vmatprep.mubr.f32.mxu0 %v201
        %359 = vmatmul.mubr.f32.gmra.mxu0 %v200
        %v360 = vpop.f32.mrf.mxu0
        %v361 = vadd.f32 0.0, %v360
        %v362 = vpop.f32.mrf.mxu0
        %363 = vmatprep.mubr.f32.mxu0 %v203
        %364 = vmatmul.mubr.f32.gmra.mxu0 %v202
        %v365 = vpop.f32.mrf.mxu0
        %v366 = vadd.f32 0.0, %v365
        %v367 = vpop.f32.mrf.mxu0
        %368 = vmatprep.mubr.f32.mxu0 %v205
        %369 = vmatmul.mubr.f32.gmra.mxu0 %v204
        %v370 = vpop.f32.mrf.mxu0
        %v371 = vadd.f32 0.0, %v370
        %v372 = vpop.f32.mrf.mxu0
        %373 = vmatprep.mubr.f32.mxu0 %v207
        %374 = vmatmul.mubr.f32.gmra.mxu0 %v206
        %v375 = vpop.f32.mrf.mxu0
        %v376 = vadd.f32 0.0, %v375
        %v377 = vpop.f32.mrf.mxu0
        %378 = vmatprep.mubr.f32.mxu0 %v209
        %379 = vmatmul.mubr.f32.gmra.mxu0 %v208
        %v380 = vpop.f32.mrf.mxu0
        %v381 = vadd.f32 0.0, %v380
        %v382 = vpop.f32.mrf.mxu0
        %383 = vmatprep.mubr.f32.mxu0 %v211
        %384 = vmatmul.mubr.f32.gmra.mxu0 %v210
        %v385 = vpop.f32.mrf.mxu0
        %v386 = vadd.f32 0.0, %v385
        %v387 = vpop.f32.mrf.mxu0
        %388 = vdwg.mxu0
        %v389 = vmul.f32 %v311, -1.0
        %v390 = vmul.f32 %v316, -1.0
        %v391 = vmul.f32 %v321, -1.0
        %v392 = vmul.f32 %v326, -1.0
        %v393 = vmul.f32 %v331, -1.0
        %v394 = vmul.f32 %v336, -1.0
        %v395 = vmul.f32 %v341, -1.0
        %v396 = vmul.f32 %v346, -1.0
        %v397 = vmul.f32 %v351, -1.0
        %v398 = vmul.f32 %v356, -1.0
        %v399 = vmul.f32 %v361, -1.0
        %v400 = vmul.f32 %v366, -1.0
        %v401 = vmul.f32 %v371, -1.0
        %v402 = vmul.f32 %v376, -1.0
        %v403 = vmul.f32 %v381, -1.0
        %v404 = vmul.f32 %v386, -1.0
        %405 = vst [vmem:[%s177] sm:$0xff] %v389
        %406 = vst [vmem:[%s177 + $0x8] sm:$0xff] %v390
        %407 = vst [vmem:[%s177 + $0x10] sm:$0xff] %v391
        %408 = vst [vmem:[%s177 + $0x18] sm:$0xff] %v392
        %409 = vst [vmem:[%s177 + $0x20] sm:$0xff] %v393
        %410 = vst [vmem:[%s177 + $0x28] sm:$0xff] %v394
        %411 = vst [vmem:[%s177 + $0x30] sm:$0xff] %v395
        %412 = vst [vmem:[%s177 + $0x38] sm:$0xff] %v396
        %413 = vst [vmem:[%s177 + $0x40] sm:$0xff] %v397
        %414 = vst [vmem:[%s177 + $0x48] sm:$0xff] %v398
        %415 = vst [vmem:[%s177 + $0x50] sm:$0xff] %v399
        %416 = vst [vmem:[%s177 + $0x58] sm:$0xff] %v400
        %417 = vst [vmem:[%s177 + $0x60] sm:$0xff] %v401
        %418 = vst [vmem:[%s177 + $0x68] sm:$0xff] %v402
        %419 = vst [vmem:[%s177 + $0x70] sm:$0xff] %v403
        %420 = vst [vmem:[%s177 + $0x78] sm:$0xff] %v404
        %s421 = sand.u32 %s75, 1
        %s422 = scalar_lea.sflag [#allocation4], %s421
        %s423 = sand.u32 %s75, 1
        %s424 = smul.addr %s423, 128
        %s425 = scalar_lea.vmem [#allocation7], %s424
        // Predicated region
        $region37: #{tpu_custom_call.1} parent=27 // pred_check
          %p426 = pneg %p85
        $region38: #{tpu_custom_call.1} parent=27 // pred_check_branch
          %428 = sbr.rel (%p426) target = $region40
        $region39: #{tpu_custom_call.1} parent=27 // pred_region
          %s429 = smul.u32 16, %s20
          %s431 = ssub.s32 2048, 2048
          %432 = vsyncadd %s422, %s431
          %s433 = smul.addr %s429, 128
          %s434 = scalar_lea.hbm %s2, %s433
          %s435 = sshll.u32 %s425, 4
          %s436 = int_to_ptr.vmem [resolvable:$true] %s435
          %441 = dma.vmem_to_hbm [thread:$0]  %s436, 2048, %s434, %s422, 128, 128, 8
        $region40: #{tpu_custom_call.1} parent=27 // pred_fallthru
          _
      $region28: #{tpu_custom_call.1} parent=5 // pred_fallthru
        _
      %p442 = scmp.le.s32.totalorder 2, %s15
      // Predicated region
      $region41: #{tpu_custom_call.1} parent=5 // pred_check
        %p443 = pneg %p442
      $region42: #{tpu_custom_call.1} parent=5 // pred_check_branch
        %445 = sbr.rel (%p443) target = $region44
      $region43: #{tpu_custom_call.1} parent=5 // pred_region
        %s446 = ssub.s32 %s15, 2
        // Predicated region
        $region45: #{tpu_custom_call.1} parent=43 // pred_check
          %p447 = pneg %p91
        $region46: #{tpu_custom_call.1} parent=43 // pred_check_branch
          %449 = sbr.rel (%p447) target = $region48
        $region47: #{tpu_custom_call.1} parent=43 // pred_region
          %s450 = sand.u32 %s76, 1
          %s451 = scalar_lea.sflag [#allocation4], %s450
          %s452 = sand.u32 %s76, 1
          %s453 = smul.addr %s452, 128
          %s454 = scalar_lea.vmem [#allocation7], %s453
          %455 = dma.done %s451, 2048
        $region48: #{tpu_custom_call.1} parent=43 // pred_fallthru
          _
      $region44: #{tpu_custom_call.1} parent=5 // pred_fallthru
        _
    $region6: #{tpu_custom_call.1} parent=1 // loop_footer
      %s19 = sadd.s32 1, %s15
    $region7: #{tpu_custom_call.1} parent=1 // loop_footer_branch
      %14 = sbr.rel target = $region3
    $region8: #{tpu_custom_call.1} parent=1 // loop_exit
      _
    %456 = vsyncpa [#allocation3], 1
    %s457 = scalar_lea.sflag [#allocation3], 1
    %458 = vsyncpa %s457, 1
    %459 = vsyncpa [#allocation6], 1
    %460 = vsyncpa [#allocation4], 1
    %s461 = scalar_lea.sflag [#allocation4], 1
    %462 = vsyncpa %s461, 1

</llo_original>
